<compile_context>
chip_gen: v5e
topology: v5e:2x2
jax: 0.10.0
libtpu: 0.0.40
codegen_flags: <defaults>
</compile_context>

<pallas_src>
import jax
import jax.numpy as jnp
from jax.experimental import pallas as pl
from jax.experimental.pallas import tpu as pltpu


def _round_up(x, m):
    return (x + m - 1) // m * m


def mlm_mlp_kernel(x_ref, w1_ref, b1_ref, g_ref, beta_ref, w2_ref, b2_ref,
                   o_ref, hn_ref):
    # x:  (tm, H) bf16          w1: (H, H) bf16
    # b1/g/beta: (1, H) f32     w2: (H, tn) bf16      b2: (1, tn) f32
    # o:  (tm, tn) f32          hn_ref: (tm, H) bf16 VMEM scratch

    # --- Linear1 + ReLU + LayerNorm: once per M-tile, hoisted out of V loop ---
    @pl.when(pl.program_id(1) == 0)
    def _():
        h = jnp.dot(x_ref[...], w1_ref[...],
                    preferred_element_type=jnp.float32) + b1_ref[...]
        h = jnp.maximum(h, 0.0)
        # LayerNorm over last dim (torch defaults: biased variance, eps=1e-5)
        mean = jnp.mean(h, axis=-1, keepdims=True)
        var = jnp.mean((h - mean) * (h - mean), axis=-1, keepdims=True)
        hn = (h - mean) * jax.lax.rsqrt(var + 1e-5)
        hn = hn * g_ref[...] + beta_ref[...]
        hn_ref[...] = hn.astype(hn_ref.dtype)

    # --- Linear2: inner vocab loop, pure MXU matmul against streamed W2 tile ---
    o_ref[...] = (jnp.dot(hn_ref[...], w2_ref[...],
                          preferred_element_type=jnp.float32)
                  + b2_ref[...]).astype(o_ref.dtype)


def mlm_forward(token_embd, pred_positions, params, *, tm=None, tn=None):
    """Forward pass of the MLM head.

    token_embd:     (B, S, H) float32
    pred_positions: (B, P)    int32
    returns:        (B, P, V) float32
    """
    B, S, H = token_embd.shape
    P = pred_positions.shape[1]
    w1, b1, gamma, beta, w2, b2 = params
    V = w2.shape[1]

    # --- gather masked-token embeddings (glue, plain JAX indexing) ---
    # TODO(synk): could be fused into the kernel via PrefetchScalarGridSpec +
    # pl.Element row gather to avoid materializing the (B*P, H) slab in HBM.
    batch_idx = jnp.repeat(jnp.arange(B, dtype=jnp.int32), P)        # (B*P,)
    flat_pos = pred_positions.reshape(-1)                            # (B*P,)
    mask_tokens = token_embd[batch_idx, flat_pos]                    # (B*P, H)

    M = B * P

    # Tile sizes.  Defaults are sized for real BERT shapes (H~768-1024,
    # V~30k): tm<=256 rows fill a 256x256 MXU, tn<=2048 bf16 columns keep the
    # double-buffered W2 stream well inside even v7x's smaller VMEM / v5e's
    # 16 MiB scoped default.  For tiny shapes, the tile collapses to the
    # (8-sublane, 128-lane)-padded problem size.
    if tm is None:
        tm = min(256, _round_up(M, 8))
    if tn is None:
        tn = min(2048, _round_up(V, 128))
    M_pad = _round_up(M, tm)
    V_pad = _round_up(V, tn)

    # bf16 activations/weights for the matmuls (f32 accumulation in-kernel).
    x = mask_tokens.astype(jnp.bfloat16)
    if M_pad != M:
        x = jnp.pad(x, ((0, M_pad - M), (0, 0)))
    w1_bf = w1.astype(jnp.bfloat16)
    w2_bf = w2.astype(jnp.bfloat16)
    b2_p = b2
    if V_pad != V:
        w2_bf = jnp.pad(w2_bf, ((0, 0), (0, V_pad - V)))
        b2_p = jnp.pad(b2, (0, V_pad - V))

    # Keep biases / LayerNorm affine params in f32, 2-D for clean broadcast.
    b1_2d = b1.reshape(1, H)
    g_2d = gamma.reshape(1, H)
    be_2d = beta.reshape(1, H)
    b2_2d = b2_p.reshape(1, V_pad)

    grid = (M_pad // tm, V_pad // tn)

    out = pl.pallas_call(
        mlm_mlp_kernel,
        out_shape=jax.ShapeDtypeStruct((M_pad, V_pad), jnp.float32),
        grid=grid,
        in_specs=[
            pl.BlockSpec((tm, H), lambda i, j: (i, 0)),   # x rows: fixed per i
            pl.BlockSpec((H, H), lambda i, j: (0, 0)),    # w1: resident
            pl.BlockSpec((1, H), lambda i, j: (0, 0)),    # b1
            pl.BlockSpec((1, H), lambda i, j: (0, 0)),    # gamma
            pl.BlockSpec((1, H), lambda i, j: (0, 0)),    # beta
            pl.BlockSpec((H, tn), lambda i, j: (0, j)),   # w2: streamed over j
            pl.BlockSpec((1, tn), lambda i, j: (0, j)),   # b2
        ],
        out_specs=pl.BlockSpec((tm, tn), lambda i, j: (i, j)),
        scratch_shapes=[pltpu.VMEM((tm, H), jnp.bfloat16)],   # persisted hn
        compiler_params=pltpu.CompilerParams(
            dimension_semantics=("parallel", "arbitrary")),
    )(x, w1_bf, b1_2d, g_2d, be_2d, w2_bf, b2_2d)

    out = out[:M, :V]
    return out.reshape(B, P, V)


def init_params(key, num_hiddens, vocab_size):
    k1, k2, k3, k4 = jax.random.split(key, 4)
    bound1 = 1.0 / (num_hiddens ** 0.5)
    w1 = jax.random.uniform(k1, (num_hiddens, num_hiddens), jnp.float32,
                            -bound1, bound1)
    b1 = jax.random.uniform(k2, (num_hiddens,), jnp.float32, -bound1, bound1)
    gamma = jnp.ones((num_hiddens,), jnp.float32)   # nn.LayerNorm init
    beta = jnp.zeros((num_hiddens,), jnp.float32)
    w2 = jax.random.uniform(k3, (num_hiddens, vocab_size), jnp.float32,
                            -bound1, bound1)
    b2 = jax.random.uniform(k4, (vocab_size,), jnp.float32, -bound1, bound1)
    return (w1, b1, gamma, beta, w2, b2)


def mlm_reference(token_embd, pred_positions, params):
    """Pure-JAX reference mirroring the PyTorch forward, with the same bf16
    rounding of matmul inputs as the kernel (f32 accumulation)."""
    B, S, H = token_embd.shape
    P = pred_positions.shape[1]
    w1, b1, gamma, beta, w2, b2 = params
    batch_idx = jnp.repeat(jnp.arange(B), P)
    x = token_embd[batch_idx, pred_positions.reshape(-1)]          # (B*P, H)
    xb = x.astype(jnp.bfloat16).astype(jnp.float32)
    w1b = w1.astype(jnp.bfloat16).astype(jnp.float32)
    w2b = w2.astype(jnp.bfloat16).astype(jnp.float32)
    h = jnp.maximum(xb @ w1b + b1, 0.0)
    mean = jnp.mean(h, axis=-1, keepdims=True)
    var = jnp.mean((h - mean) ** 2, axis=-1, keepdims=True)
    hn = (h - mean) / jnp.sqrt(var + 1e-5) * gamma + beta
    hn = hn.astype(jnp.bfloat16).astype(jnp.float32)
    y = hn @ w2b + b2
    return y.reshape(B, P, -1)


if __name__ == "__main__":
    key = jax.random.PRNGKey(0)
    k_embd, k_pos, k_par = jax.random.split(key, 3)

    batch, seq, num_hiddens, vocab_size, num_masktks = 2, 8, 32, 64, 3

    token_embd = jax.random.normal(k_embd, (batch, seq, num_hiddens),
                                   dtype=jnp.float32)
    pred_positions = jax.random.randint(k_pos, (batch, num_masktks), 0, seq,
                                        dtype=jnp.int32)
    params = init_params(k_par, num_hiddens, vocab_size)

    out = mlm_forward(token_embd, pred_positions, params)
    out = jax.block_until_ready(out)

    ref = mlm_reference(token_embd, pred_positions, params)
    assert out.shape == (batch, num_masktks, vocab_size)
    assert jnp.allclose(out, ref, atol=1e-2, rtol=1e-2), "mismatch vs reference"

    print("KERNEL_OK")
</pallas_src>

<mosaic_0001>
module attributes {stable_mosaic.version = 11 : i64} {
  func.func @mlm_mlp_kernel(%arg0: i32, %arg1: i32, %arg2: memref<8x32xbf16, #tpu.memory_space<vmem>>, %arg3: memref<32x32xbf16, #tpu.memory_space<vmem>>, %arg4: memref<1x32xf32, #tpu.memory_space<vmem>>, %arg5: memref<1x32xf32, #tpu.memory_space<vmem>>, %arg6: memref<1x32xf32, #tpu.memory_space<vmem>>, %arg7: memref<32x128xbf16, #tpu.memory_space<vmem>>, %arg8: memref<1x128xf32, #tpu.memory_space<vmem>>, %arg9: memref<8x128xf32, #tpu.memory_space<vmem>>, %arg10: memref<8x32xbf16, #tpu.memory_space<vmem>>) attributes {dimension_semantics = [#tpu.dimension_semantics<parallel>, #tpu.dimension_semantics<arbitrary>], iteration_bounds = array<i64: 1, 1>, scalar_prefetch = 0 : i64, scratch_operands = 1 : i64, tpu.core_type = #tpu.core_type<tc>, window_params = [{transform_indices = @transform_0, window_bounds = array<i64: 8, 32>}, {pipeline_mode = #tpu.pipeline_mode<synchronous>, transform_indices = @transform_1, window_bounds = array<i64: 32, 32>}, {pipeline_mode = #tpu.pipeline_mode<synchronous>, transform_indices = @transform_2, window_bounds = array<i64: 1, 32>}, {pipeline_mode = #tpu.pipeline_mode<synchronous>, transform_indices = @transform_3, window_bounds = array<i64: 1, 32>}, {pipeline_mode = #tpu.pipeline_mode<synchronous>, transform_indices = @transform_4, window_bounds = array<i64: 1, 32>}, {transform_indices = @transform_5, window_bounds = array<i64: 32, 128>}, {transform_indices = @transform_6, window_bounds = array<i64: 1, 128>}, {transform_indices = @transform_7, window_bounds = array<i64: 8, 128>}]} {
    %c0_i32 = arith.constant 0 : i32
    %0 = arith.cmpi eq, %arg1, %c0_i32 : i32
    %1 = arith.extui %0 : i1 to i32
    %c0_i32_0 = arith.constant 0 : i32
    %2 = arith.cmpi ne, %1, %c0_i32_0 : i32
    scf.if %2 {
      %c0_8 = arith.constant 0 : index
      %c0_9 = arith.constant 0 : index
      %10 = vector.load %arg2[%c0_8, %c0_9] : memref<8x32xbf16, #tpu.memory_space<vmem>>, vector<8x32xbf16>
      %c0_10 = arith.constant 0 : index
      %c0_11 = arith.constant 0 : index
      %11 = vector.load %arg3[%c0_10, %c0_11] : memref<32x32xbf16, #tpu.memory_space<vmem>>, vector<32x32xbf16>
      %cst_12 = arith.constant dense<0.000000e+00> : vector<8x32xf32>
      %12 = tpu.matmul %10, %11, %cst_12 {dimension_numbers = #tpu.dot_dimension_numbers<[1], [0], [0], [1], [0, 0, 1, 1], [], []>} : vector<8x32xbf16>, vector<32x32xbf16>, vector<8x32xf32> -> vector<8x32xf32>
      %c0_13 = arith.constant 0 : index
      %c0_14 = arith.constant 0 : index
      %13 = vector.load %arg4[%c0_13, %c0_14] : memref<1x32xf32, #tpu.memory_space<vmem>>, vector<1x32xf32>
      %14 = vector.broadcast %13 : vector<1x32xf32> to vector<8x32xf32>
      %15 = arith.addf %12, %14 : vector<8x32xf32>
      %cst_15 = arith.constant 0.000000e+00 : f32
      %16 = vector.broadcast %cst_15 : f32 to vector<8x32xf32>
      %17 = arith.maximumf %15, %16 : vector<8x32xf32>
      %cst_16 = arith.constant dense<0.000000e+00> : vector<8xf32>
      %18 = vector.multi_reduction <add>, %17, %cst_16 [1] : vector<8x32xf32> to vector<8xf32>
      %19 = vector.shape_cast %18 : vector<8xf32> to vector<8x1xf32>
      %cst_17 = arith.constant 3.200000e+01 : f32
      %20 = vector.broadcast %cst_17 : f32 to vector<8x1xf32>
      %21 = arith.divf %19, %20 : vector<8x1xf32>
      %22 = vector.broadcast %21 : vector<8x1xf32> to vector<8x32xf32>
      %23 = arith.subf %17, %22 : vector<8x32xf32>
      %24 = vector.broadcast %21 : vector<8x1xf32> to vector<8x32xf32>
      %25 = arith.subf %17, %24 : vector<8x32xf32>
      %26 = arith.mulf %23, %25 : vector<8x32xf32>
      %cst_18 = arith.constant dense<0.000000e+00> : vector<8xf32>
      %27 = vector.multi_reduction <add>, %26, %cst_18 [1] : vector<8x32xf32> to vector<8xf32>
      %28 = vector.shape_cast %27 : vector<8xf32> to vector<8x1xf32>
      %cst_19 = arith.constant 3.200000e+01 : f32
      %29 = vector.broadcast %cst_19 : f32 to vector<8x1xf32>
      %30 = arith.divf %28, %29 : vector<8x1xf32>
      %31 = vector.broadcast %21 : vector<8x1xf32> to vector<8x32xf32>
      %32 = arith.subf %17, %31 : vector<8x32xf32>
      %cst_20 = arith.constant 9.99999974E-6 : f32
      %33 = vector.broadcast %cst_20 : f32 to vector<8x1xf32>
      %34 = arith.addf %30, %33 : vector<8x1xf32>
      %35 = math.rsqrt %34 : vector<8x1xf32>
      %36 = vector.broadcast %35 : vector<8x1xf32> to vector<8x32xf32>
      %37 = arith.mulf %32, %36 : vector<8x32xf32>
      %c0_21 = arith.constant 0 : index
      %c0_22 = arith.constant 0 : index
      %38 = vector.load %arg5[%c0_21, %c0_22] : memref<1x32xf32, #tpu.memory_space<vmem>>, vector<1x32xf32>
      %39 = vector.broadcast %38 : vector<1x32xf32> to vector<8x32xf32>
      %40 = arith.mulf %37, %39 : vector<8x32xf32>
      %c0_23 = arith.constant 0 : index
      %c0_24 = arith.constant 0 : index
      %41 = vector.load %arg6[%c0_23, %c0_24] : memref<1x32xf32, #tpu.memory_space<vmem>>, vector<1x32xf32>
      %42 = vector.broadcast %41 : vector<1x32xf32> to vector<8x32xf32>
      %43 = arith.addf %40, %42 : vector<8x32xf32>
      %44 = arith.truncf %43 : vector<8x32xf32> to vector<8x32xbf16>
      %c0_25 = arith.constant 0 : index
      %c0_26 = arith.constant 0 : index
      %45 = vector.load %arg10[%c0_25, %c0_26] : memref<8x32xbf16, #tpu.memory_space<vmem>>, vector<8x32xbf16>
      tpu.vector_store %arg10[%c0_25, %c0_26], %44 {strides = array<i32>} : memref<8x32xbf16, #tpu.memory_space<vmem>>, vector<8x32xbf16>,
    } else {
    }
    %c0 = arith.constant 0 : index
    %c0_1 = arith.constant 0 : index
    %3 = vector.load %arg10[%c0, %c0_1] : memref<8x32xbf16, #tpu.memory_space<vmem>>, vector<8x32xbf16>
    %c0_2 = arith.constant 0 : index
    %c0_3 = arith.constant 0 : index
    %4 = vector.load %arg7[%c0_2, %c0_3] : memref<32x128xbf16, #tpu.memory_space<vmem>>, vector<32x128xbf16>
    %cst = arith.constant dense<0.000000e+00> : vector<8x128xf32>
    %5 = tpu.matmul %3, %4, %cst {dimension_numbers = #tpu.dot_dimension_numbers<[1], [0], [0], [1], [0, 0, 1, 1], [], []>} : vector<8x32xbf16>, vector<32x128xbf16>, vector<8x128xf32> -> vector<8x128xf32>
    %c0_4 = arith.constant 0 : index
    %c0_5 = arith.constant 0 : index
    %6 = vector.load %arg8[%c0_4, %c0_5] : memref<1x128xf32, #tpu.memory_space<vmem>>, vector<1x128xf32>
    %7 = vector.broadcast %6 : vector<1x128xf32> to vector<8x128xf32>
    %8 = arith.addf %5, %7 : vector<8x128xf32>
    %c0_6 = arith.constant 0 : index
    %c0_7 = arith.constant 0 : index
    %9 = vector.load %arg9[%c0_6, %c0_7] : memref<8x128xf32, #tpu.memory_space<vmem>>, vector<8x128xf32>
    tpu.vector_store %arg9[%c0_6, %c0_7], %8 {strides = array<i32>} : memref<8x128xf32, #tpu.memory_space<vmem>>, vector<8x128xf32>,
    return
  }
  func.func @transform_0(%arg0: i32, %arg1: i32) -> (i32, i32) {
    %c0_i32 = arith.constant 0 : i32
    %c0_i32_0 = arith.constant 0 : i32
    return %arg0, %c0_i32 : i32, i32
  }
  func.func @transform_1(%arg0: i32, %arg1: i32) -> (i32, i32) {
    %c0_i32 = arith.constant 0 : i32
    %c0_i32_0 = arith.constant 0 : i32
    %c0_i32_1 = arith.constant 0 : i32
    return %c0_i32, %c0_i32_0 : i32, i32
  }
  func.func @transform_2(%arg0: i32, %arg1: i32) -> (i32, i32) {
    %c0_i32 = arith.constant 0 : i32
    %c0_i32_0 = arith.constant 0 : i32
    %c0_i32_1 = arith.constant 0 : i32
    return %c0_i32, %c0_i32_0 : i32, i32
  }
  func.func @transform_3(%arg0: i32, %arg1: i32) -> (i32, i32) {
    %c0_i32 = arith.constant 0 : i32
    %c0_i32_0 = arith.constant 0 : i32
    %c0_i32_1 = arith.constant 0 : i32
    return %c0_i32, %c0_i32_0 : i32, i32
  }
  func.func @transform_4(%arg0: i32, %arg1: i32) -> (i32, i32) {
    %c0_i32 = arith.constant 0 : i32
    %c0_i32_0 = arith.constant 0 : i32
    %c0_i32_1 = arith.constant 0 : i32
    return %c0_i32, %c0_i32_0 : i32, i32
  }
  func.func @transform_5(%arg0: i32, %arg1: i32) -> (i32, i32) {
    %c0_i32 = arith.constant 0 : i32
    %c0_i32_0 = arith.constant 0 : i32
    return %c0_i32, %arg1 : i32, i32
  }
  func.func @transform_6(%arg0: i32, %arg1: i32) -> (i32, i32) {
    %c0_i32 = arith.constant 0 : i32
    %c0_i32_0 = arith.constant 0 : i32
    return %c0_i32, %arg1 : i32, i32
  }
  func.func @transform_7(%arg0: i32, %arg1: i32) -> (i32, i32) {
    %c0_i32 = arith.constant 0 : i32
    return %arg0, %arg1 : i32, i32
  }
}

</mosaic_0001>

<llo_original>
// kernel: tpu_custom_call.1
$region0: #{tpu_custom_call.1}
  #allocation0 [shape = 'u32[]', space=smem, size = 0x4, offset = 0x4, fixed_abs, tag = 'smem constant byte address 0x4 - core index']
  #allocation1 [shape = 'u32[72,128]{1,0:T(1,128)}', space=vmem, size = 0x9000, scoped, tag = 'internal scratch']
  #allocation2 [shape = 'bf16[8,32]{1,0:T(8,128)(2,1)}', space=vmem, size = 0x800, scoped, tag = 'scratch operand']
  %s0 = inlined_call_operand.hbm [shape: bf16[8,32], index: 0, kind: input, shape index: {}]
  %s1 = inlined_call_operand.hbm [shape: bf16[32,32], index: 1, kind: input, shape index: {}]
  %s2 = inlined_call_operand.vmem [shape: f32[1,32], index: 2, kind: input, shape index: {}]
  %s3 = inlined_call_operand.vmem [shape: f32[1,32], index: 3, kind: input, shape index: {}]
  %s4 = inlined_call_operand.vmem [shape: f32[1,32], index: 4, kind: input, shape index: {}]
  %s5 = inlined_call_operand.hbm [shape: bf16[32,128], index: 5, kind: input, shape index: {}]
  %s6 = inlined_call_operand.vmem [shape: f32[1,128], index: 6, kind: input, shape index: {}]
  %s7 = inlined_call_operand.hbm [shape: f32[8,128], index: 7, kind: output, shape index: {}]
  %s8 = sld [smem:[#allocation0]]
  $region54: #{tpu_custom_call.1} parent=0
    _
  %s10 = ssub.s32 1, %s8
  %s11 = scalar_select 0, %s10, %s8
  $region1: #{tpu_custom_call.1} parent=0
    #allocation3 [shape = 'u8[2048]{0}', space=vmem, size = 0x800, scoped, tag = 'input window, operand 0, single buffered']
    #allocation4 [shape = 's32[1]{0}', space=sflag, size = 0x4, scoped, tag = 'scoped memory for tpu_custom_call.1']
    #allocation5 [shape = 's32[1]{0}', space=sflag, size = 0x4, scoped, tag = 'scoped memory for tpu_custom_call.1']
    #allocation6 [shape = 'u8[8192]{0}', space=vmem, size = 0x2000, scoped, tag = 'input window, operand 1, single buffered']
    #allocation7 [shape = 's32[1]{0}', space=sflag, size = 0x4, scoped, tag = 'scoped memory for tpu_custom_call.1']
    #allocation8 [shape = 'u8[8192]{0}', space=vmem, size = 0x2000, scoped, tag = 'input window, operand 5, single buffered']
    #allocation9 [shape = 'u8[4096]{0}', space=vmem, size = 0x1000, scoped, tag = 'output window, operand 0, single buffered']
    %12 = vsyncpa [#allocation4], 0
    %13 = vsyncpa [#allocation7], 0
    %14 = vsyncpa [#allocation5], 0
    // Predicated region
    $region2: #{tpu_custom_call.1} parent=1 // pred_check
      _
    $region3: #{tpu_custom_call.1} parent=1 // pred_check_branch
      %16 = sbr.rel (0) target = $region5
    $region4: #{tpu_custom_call.1} parent=1 // pred_region
      %18 = vsyncadd [#allocation4], 0
      %s20 = sshll.u32 %s0, 4
      %s21 = int_to_ptr.hbm [resolvable:$true] %s20
      %s22 = sshll.u32 [#allocation3], 4
      %s23 = int_to_ptr.vmem [resolvable:$true] %s22
      %25 = dma.hbm_to_vmem [thread:$0]  %s21, 64, %s23, [#allocation4]
    $region5: #{tpu_custom_call.1} parent=1 // pred_fallthru
      _
    // Predicated region
    $region6: #{tpu_custom_call.1} parent=1 // pred_check
      _
    $region7: #{tpu_custom_call.1} parent=1 // pred_check_branch
      %27 = sbr.rel (0) target = $region9
    $region8: #{tpu_custom_call.1} parent=1 // pred_region
      %29 = vsyncadd [#allocation7], 0
      %s30 = sshll.u32 %s1, 4
      %s31 = int_to_ptr.hbm [resolvable:$true] %s30
      %s32 = sshll.u32 [#allocation6], 4
      %s33 = int_to_ptr.vmem [resolvable:$true] %s32
      %38 = dma.hbm_to_vmem [thread:$0]  %s31, 256, %s33, [#allocation7], 64, 64, 4
    $region9: #{tpu_custom_call.1} parent=1 // pred_fallthru
      _
    // Predicated region
    $region10: #{tpu_custom_call.1} parent=1 // pred_check
      _
    $region11: #{tpu_custom_call.1} parent=1 // pred_check_branch
      %40 = sbr.rel (0) target = $region13
    $region12: #{tpu_custom_call.1} parent=1 // pred_region
      _
    $region13: #{tpu_custom_call.1} parent=1 // pred_fallthru
      _
    // Predicated region
    $region14: #{tpu_custom_call.1} parent=1 // pred_check
      _
    $region15: #{tpu_custom_call.1} parent=1 // pred_check_branch
      %42 = sbr.rel (0) target = $region17
    $region16: #{tpu_custom_call.1} parent=1 // pred_region
      _
    $region17: #{tpu_custom_call.1} parent=1 // pred_fallthru
      _
    // Predicated region
    $region18: #{tpu_custom_call.1} parent=1 // pred_check
      _
    $region19: #{tpu_custom_call.1} parent=1 // pred_check_branch
      %44 = sbr.rel (0) target = $region21
    $region20: #{tpu_custom_call.1} parent=1 // pred_region
      _
    $region21: #{tpu_custom_call.1} parent=1 // pred_fallthru
      _
    // Predicated region
    $region22: #{tpu_custom_call.1} parent=1 // pred_check
      _
    $region23: #{tpu_custom_call.1} parent=1 // pred_check_branch
      %46 = sbr.rel (0) target = $region25
    $region24: #{tpu_custom_call.1} parent=1 // pred_region
      %48 = vsyncadd [#allocation7], 0
      %s49 = sshll.u32 %s5, 4
      %s50 = int_to_ptr.hbm [resolvable:$true] %s49
      %s51 = sshll.u32 [#allocation8], 4
      %s52 = int_to_ptr.vmem [resolvable:$true] %s51
      %57 = dma.hbm_to_vmem [thread:$0]  %s50, 256, %s52, [#allocation7], 64, 64, 4
    $region25: #{tpu_custom_call.1} parent=1 // pred_fallthru
      _
    // Predicated region
    $region26: #{tpu_custom_call.1} parent=1 // pred_check
      _
    $region27: #{tpu_custom_call.1} parent=1 // pred_check_branch
      %59 = sbr.rel (0) target = $region29
    $region28: #{tpu_custom_call.1} parent=1 // pred_region
      _
    $region29: #{tpu_custom_call.1} parent=1 // pred_fallthru
      _
    // Predicated region
    $region30: #{tpu_custom_call.1} parent=1 // pred_check
      _
    $region31: #{tpu_custom_call.1} parent=1 // pred_check_branch
      %61 = sbr.rel (0) target = $region33
    $region32: #{tpu_custom_call.1} parent=1 // pred_region
      %63 = dma.done [#allocation4], 64
    $region33: #{tpu_custom_call.1} parent=1 // pred_fallthru
      _
    // Predicated region
    $region34: #{tpu_custom_call.1} parent=1 // pred_check
      _
    $region35: #{tpu_custom_call.1} parent=1 // pred_check_branch
      %65 = sbr.rel (0) target = $region37
    $region36: #{tpu_custom_call.1} parent=1 // pred_region
      %67 = dma.done [#allocation7], 256
    $region37: #{tpu_custom_call.1} parent=1 // pred_fallthru
      _
    // Predicated region
    $region38: #{tpu_custom_call.1} parent=1 // pred_check
      _
    $region39: #{tpu_custom_call.1} parent=1 // pred_check_branch
      %69 = sbr.rel (0) target = $region41
    $region40: #{tpu_custom_call.1} parent=1 // pred_region
      %71 = dma.done [#allocation7], 256
    $region41: #{tpu_custom_call.1} parent=1 // pred_fallthru
      _
    %p73 = scmp.eq.s32.totalorder 0, 0
    // Predicated region
    $region42: #{tpu_custom_call.1} parent=1 // pred_check
      %p74 = pneg %p73
    $region43: #{tpu_custom_call.1} parent=1 // pred_check_branch
      %76 = sbr.rel (%p74) target = $region45
    $region44: #{tpu_custom_call.1} parent=1 // pred_region
      %v77 = vld [vmem:[#allocation3] sm:$0xf]
      %v78 = vld [vmem:[#allocation6] sm:$0xf]
      %v79 = vld [vmem:[#allocation6 + $0x4] sm:$0xf]
      %v80 = vld [vmem:[#allocation6 + $0x8] sm:$0xf]
      %v81 = vld [vmem:[#allocation6 + $0xc] sm:$0xf]
      %v82 = vld [vmem:[%s2] sm:$0x1]
      %v84 = vperm.slane %v82, 0
      %v90 = vunpack.c.l.b16 %v78
      %v91 = vunpack.c.l.b16 %v79
      %v92 = vunpack.c.l.b16 %v80
      %v93 = vunpack.c.l.b16 %v81
      %v94 = vpack.c.b16 %v91, %v90
      %v95 = vpack.c.b16 %v93, %v92
      %vm98 = vcmask 261120
      %v100 = vsel %vm98, %v77, 0
      %102 = vmatpush.bf16.msra.mxu0 0
      %103 = vmatpush.bf16.msra.mxu0 0
      %104 = vmatpush.bf16.msra.mxu0 0
      %105 = vmatpush.bf16.msra.mxu0 0
      %106 = vmatpush.bf16.msra.mxu0 0
      %107 = vmatpush.bf16.msra.mxu0 0
      %108 = vmatpush.bf16.msra.mxu0 %v95
      %109 = vmatpush.bf16.msra.mxu0 %v94
      %110 = vmatmul.bf16.gmra.mxu0 %v100
      %v111 = vpop.f32.mrf.mxu0
      %v112 = vadd.f32 %v84, %v111
      %v113 = vpop.f32.mrf.mxu0
      %114 = vdwg.mxu0
      %v115 = vmax.f32 %v112, 0.0
      %v116 = vsel %vm98, %v115, 0.0
      %117 = vadd.xlane.f32.xlu0 %v116
      %v118 = vpop.xlane.xlu0 %117
      %v119 = vrcp.pop 32.0
      %v120 = vmul.f32 32.0, %v119
      %v121 = vsub.f32 1.0, %v120
      %v122 = vmul.f32 %v119, %v121
      %v123 = vadd.f32 %v119, %v122
      %vm124 = vweird.f32 %v119
      %v125 = vsel %vm124, %v119, %v123
      %v126 = vmul.f32 %v118, %v125
      %v127 = vsub.f32 %v115, %v126
      %v128 = vmul.f32 %v127, %v127
      %v129 = vsel %vm98, %v128, 0.0
      %130 = vadd.xlane.f32.xlu0 %v129
      %v131 = vpop.xlane.xlu0 %130
      %v132 = vmul.f32 %v131, %v125
      %v133 = vadd.f32 %v132, 1e-05
      %v134 = vrsqrt.pop %v133
      %v135 = vmul.f32 %v134, %v133
      %v136 = vmul.f32 %v135, %v134
      %v137 = vmul.f32 0.5, %v136
      %v138 = vsub.f32 1.5, %v137
      %v139 = vmul.f32 %v134, %v138
      %vm140 = vweird.f32 %v133
      %vm141 = vweird.f32 %v134
      %vm142 = vmor %vm140, %vm141
      %v143 = vsel %vm142, %v134, %v139
      %v144 = vmul.f32 %v127, %v143
      %v145 = vld [vmem:[%s3] sm:$0x1]
      %v147 = vperm.slane %v145, 0
      %v149 = vmul.f32 %v144, %v147
      %v150 = vld [vmem:[%s4] sm:$0x1]
      %v152 = vperm.slane %v150, 0
      %v154 = vadd.f32 %v149, %v152
      %v155 = vpack.c.bf16 %v154, %v154
      %vm156 = vcmask 257024
      %157 = vst.msk [vmem:[#allocation2] sm:$0xf] %vm156, %v155
    $region45: #{tpu_custom_call.1} parent=1 // pred_fallthru
      _
    %v158 = vld [vmem:[#allocation2] sm:$0xf]
    %v159 = vld [vmem:[#allocation8] sm:$0xf]
    %v160 = vld [vmem:[#allocation8 + $0x4] sm:$0xf]
    %v161 = vld [vmem:[#allocation8 + $0x8] sm:$0xf]
    %v162 = vld [vmem:[#allocation8 + $0xc] sm:$0xf]
    %v163 = vld [vmem:[%s6] sm:$0x1]
    %v165 = vperm.slane %v163, 0
    %v171 = vunpack.c.l.b16 %v159
    %v172 = vunpack.c.l.b16 %v160
    %v173 = vunpack.c.l.b16 %v161
    %v174 = vunpack.c.l.b16 %v162
    %v175 = vpack.c.b16 %v172, %v171
    %v176 = vpack.c.b16 %v174, %v173
    %vm179 = vcmask 261120
    %v181 = vsel %vm179, %v158, 0
    %183 = vmatpush.bf16.msra.mxu0 0
    %184 = vmatpush.bf16.msra.mxu0 0
    %185 = vmatpush.bf16.msra.mxu0 0
    %186 = vmatpush.bf16.msra.mxu0 0
    %187 = vmatpush.bf16.msra.mxu0 0
    %188 = vmatpush.bf16.msra.mxu0 0
    %189 = vmatpush.bf16.msra.mxu0 %v176
    %190 = vmatpush.bf16.msra.mxu0 %v175
    %191 = vmatmul.bf16.gmra.mxu0 %v181
    %v192 = vpop.f32.mrf.mxu0
    %v193 = vadd.f32 %v165, %v192
    %v194 = vpop.f32.mrf.mxu0
    %195 = vdwg.mxu0
    %196 = vst [vmem:[#allocation9] sm:$0xff] %v193
    // Predicated region
    $region46: #{tpu_custom_call.1} parent=1 // pred_check
      _
    $region47: #{tpu_custom_call.1} parent=1 // pred_check_branch
      %198 = sbr.rel (0) target = $region49
    $region48: #{tpu_custom_call.1} parent=1 // pred_region
      %200 = vsyncadd [#allocation5], 0
      %s202 = sshll.u32 [#allocation9], 4
      %s203 = int_to_ptr.vmem [resolvable:$true] %s202
      %s204 = sshll.u32 %s7, 4
      %s205 = int_to_ptr.hbm [resolvable:$true] %s204
      %207 = dma.vmem_to_hbm [thread:$0]  %s203, 128, %s205, [#allocation5]
    $region49: #{tpu_custom_call.1} parent=1 // pred_fallthru
      _
    // Predicated region
    $region50: #{tpu_custom_call.1} parent=1 // pred_check
      _
    $region51: #{tpu_custom_call.1} parent=1 // pred_check_branch
      %209 = sbr.rel (0) target = $region53
    $region52: #{tpu_custom_call.1} parent=1 // pred_region
      %211 = dma.done [#allocation5], 128
    $region53: #{tpu_custom_call.1} parent=1 // pred_fallthru
      _
    %212 = vsyncpa [#allocation4], 1
    %213 = vsyncpa [#allocation7], 1
    %214 = vsyncpa [#allocation5], 1

</llo_original>
